<compile_context>
chip_gen: v7x
topology: tpu7x:2x2x1
jax: 0.10.0
libtpu: 0.0.40
codegen_flags: <defaults>
</compile_context>

<pallas_src>
import functools
import math

import jax
import jax.numpy as jnp
from jax.experimental import pallas as pl
from jax.experimental.pallas import tpu as pltpu

# MXU operand dtype.  bf16 halves HBM/VMEM weight traffic and hits the fast
# MXU path on v6e/v7x (and is fine on v5e's MXU); all VPU math stays f32.
MXU_DTYPE = jnp.bfloat16


# ---------------------------------------------------------------------------
# tiling helper
# ---------------------------------------------------------------------------
def _pick_tile(dim, max_tile, align):
    """Largest tile <= max_tile that divides `dim` and is `align`-aligned.

    Falls back to the full dim (always a legal block) when no aligned divisor
    exists (e.g. odd vocab sizes, small d_model)."""
    if dim <= max_tile:
        return dim
    t = (max_tile // align) * align
    while t >= align:
        if dim % t == 0:
            return t
        t -= align
    return dim


# ---------------------------------------------------------------------------
# Pallas kernels
# ---------------------------------------------------------------------------
def _linear_kernel(x_ref, w_ref, b_ref, o_ref, acc_ref, *, activation):
    """Tiled o = act(x @ w + b).  grid=(M/tm, N/tn, K/tk), acc in VMEM."""
    k = pl.program_id(2)

    @pl.when(k == 0)
    def _():
        acc_ref[...] = jnp.zeros_like(acc_ref)

    acc_ref[...] += jnp.dot(x_ref[...].astype(MXU_DTYPE),
                            w_ref[...].astype(MXU_DTYPE),
                            preferred_element_type=jnp.float32)

    @pl.when(k == pl.num_programs(2) - 1)
    def _():
        y = acc_ref[...] + b_ref[...]
        if activation == "relu":
            y = jnp.maximum(y, 0.0)
        o_ref[...] = y.astype(o_ref.dtype)


def _linear_res_ln_kernel(x_ref, w_ref, b_ref, r_ref, g_ref, beta_ref,
                          o_ref, acc_ref):
    """Tiled o = LayerNorm(residual + x @ w + b).  grid=(M/tm, K/tk)."""
    k = pl.program_id(1)

    @pl.when(k == 0)
    def _():
        acc_ref[...] = jnp.zeros_like(acc_ref)

    acc_ref[...] += jnp.dot(x_ref[...].astype(MXU_DTYPE),
                            w_ref[...].astype(MXU_DTYPE),
                            preferred_element_type=jnp.float32)

    @pl.when(k == pl.num_programs(1) - 1)
    def _():
        s = acc_ref[...] + b_ref[...] + r_ref[...]
        mu = jnp.mean(s, axis=-1, keepdims=True)
        var = jnp.mean(jnp.square(s - mu), axis=-1, keepdims=True)
        y = (s - mu) * jax.lax.rsqrt(var + 1e-5) * g_ref[...] + beta_ref[...]
        o_ref[...] = y.astype(o_ref.dtype)


def _ffn_kernel(x_ref, w1_ref, b1_ref, w2_ref, b2_ref, g_ref, beta_ref, o_ref):
    """Fused o = LayerNorm(x + relu(x@w1+b1)@w2 + b2); hidden stays in VMEM.

    TODO(synk): for very large d_ff the (D,d_ff)/(d_ff,D) weights should be
    tiled over d_ff too (two-stage accumulation); fine at these sizes.
    """
    x = x_ref[...]                                            # f32 (residual)
    h = jnp.dot(x.astype(MXU_DTYPE), w1_ref[...].astype(MXU_DTYPE),
                preferred_element_type=jnp.float32)
    h = jnp.maximum(h + b1_ref[...], 0.0)
    y = jnp.dot(h.astype(MXU_DTYPE), w2_ref[...].astype(MXU_DTYPE),
                preferred_element_type=jnp.float32)
    s = x + y + b2_ref[...]
    mu = jnp.mean(s, axis=-1, keepdims=True)
    var = jnp.mean(jnp.square(s - mu), axis=-1, keepdims=True)
    o_ref[...] = ((s - mu) * jax.lax.rsqrt(var + 1e-5) * g_ref[...]
                  + beta_ref[...]).astype(o_ref.dtype)


def _mha_core(q, k, v, mask, o_ref, num_heads):
    """All heads of one batch element; writes (Tq, D) into o_ref[0].

    Per-head stores populate the VMEM output tile; the HBM writeback is one
    lane-dense (1, Tq, D) block per grid step (and at realistic dh=64/128 the
    per-head stores are lane-dense too).  1/sqrt(dh) is pre-folded into the Q
    projection weights.
    """
    Tq, D = q.shape
    dh = D // num_heads
    qb = q.astype(MXU_DTYPE)
    kb = k.astype(MXU_DTYPE)
    vb = v.astype(MXU_DTYPE)
    for h in range(num_heads):                 # static unroll, one grid step
        sl = slice(h * dh, (h + 1) * dh)
        # q k^T via dot_general contracting last dims (no explicit transpose)
        s = jax.lax.dot_general(qb[:, sl], kb[:, sl],
                                (((1,), (1,)), ((), ())),
                                preferred_element_type=jnp.float32)
        s = jnp.where(mask > 0.0, s, -1e10)    # masked_fill(mask==0, -1e10)
        s = s - jnp.max(s, axis=-1, keepdims=True)
        e = jnp.exp(s)
        p = e * pl.reciprocal(jnp.sum(e, axis=-1, keepdims=True), approx=True)
        o = jnp.dot(p.astype(MXU_DTYPE), vb[:, sl],
                    preferred_element_type=jnp.float32)
        o_ref[0, :, sl] = o.astype(o_ref.dtype)


def _attn_self_kernel(qkv_ref, m_ref, o_ref, *, num_heads):
    D = o_ref.shape[2]
    qkv = qkv_ref[0]                           # (T, 3D) fused QKV projection
    _mha_core(qkv[:, :D], qkv[:, D:2 * D], qkv[:, 2 * D:],
              m_ref[0], o_ref, num_heads)


def _attn_cross_kernel(q_ref, kv_ref, m_ref, o_ref, *, num_heads):
    D = o_ref.shape[2]
    kv = kv_ref[0]                             # (Tk, 2D) fused KV projection
    _mha_core(q_ref[0], kv[:, :D], kv[:, D:], m_ref[0], o_ref, num_heads)


# ---------------------------------------------------------------------------
# Pallas wrappers
# ---------------------------------------------------------------------------
def pallas_linear(x, w, b, activation=None):
    """Tiled, pipelined y = act(x @ w + b).  x:(M,K) f32, w:(K,N) bf16/f32."""
    M, K = x.shape
    N = w.shape[1]
    tm = _pick_tile(M, 256, 8)
    tn = _pick_tile(N, 512, 128)
    tk = _pick_tile(K, 512, 128)
    grid = (M // tm, N // tn, K // tk)
    return pl.pallas_call(
        functools.partial(_linear_kernel, activation=activation),
        grid_spec=pltpu.PrefetchScalarGridSpec(
            num_scalar_prefetch=0,
            grid=grid,
            in_specs=[pl.BlockSpec((tm, tk), lambda i, j, k: (i, k)),
                      pl.BlockSpec((tk, tn), lambda i, j, k: (k, j)),
                      pl.BlockSpec((1, tn), lambda i, j, k: (0, j))],
            out_specs=pl.BlockSpec((tm, tn), lambda i, j, k: (i, j)),
            scratch_shapes=[pltpu.VMEM((tm, tn), jnp.float32)]),
        out_shape=jax.ShapeDtypeStruct((M, N), jnp.float32),
        compiler_params=pltpu.CompilerParams(
            dimension_semantics=("parallel", "parallel", "arbitrary")),
    )(x, w, b.reshape(1, N))


def pallas_linear_res_ln(x, w, b, residual, gamma, beta):
    """Tiled y = LayerNorm(residual + x @ w + b) (fused epilogue)."""
    M, K = x.shape
    N = w.shape[1]
    tm = _pick_tile(M, 256, 8)
    tk = _pick_tile(K, 512, 128)
    grid = (M // tm, K // tk)
    return pl.pallas_call(
        _linear_res_ln_kernel,
        grid_spec=pltpu.PrefetchScalarGridSpec(
            num_scalar_prefetch=0,
            grid=grid,
            in_specs=[pl.BlockSpec((tm, tk), lambda i, k: (i, k)),
                      pl.BlockSpec((tk, N), lambda i, k: (k, 0)),
                      pl.BlockSpec((1, N), lambda i, k: (0, 0)),
                      pl.BlockSpec((tm, N), lambda i, k: (i, 0)),
                      pl.BlockSpec((1, N), lambda i, k: (0, 0)),
                      pl.BlockSpec((1, N), lambda i, k: (0, 0))],
            out_specs=pl.BlockSpec((tm, N), lambda i, k: (i, 0)),
            scratch_shapes=[pltpu.VMEM((tm, N), jnp.float32)]),
        out_shape=jax.ShapeDtypeStruct((M, N), jnp.float32),
        compiler_params=pltpu.CompilerParams(
            dimension_semantics=("parallel", "arbitrary")),
    )(x, w, b.reshape(1, N), residual, gamma.reshape(1, N), beta.reshape(1, N))


def pallas_ffn(x, w1, b1, w2, b2, gamma, beta):
    """Fused feed-forward + residual + LayerNorm, grid over row tiles."""
    M, D = x.shape
    F = w1.shape[1]
    tm = _pick_tile(M, 256, 8)
    return pl.pallas_call(
        _ffn_kernel,
        grid=(M // tm,),
        in_specs=[pl.BlockSpec((tm, D), lambda i: (i, 0)),
                  pl.BlockSpec((D, F), lambda i: (0, 0)),
                  pl.BlockSpec((1, F), lambda i: (0, 0)),
                  pl.BlockSpec((F, D), lambda i: (0, 0)),
                  pl.BlockSpec((1, D), lambda i: (0, 0)),
                  pl.BlockSpec((1, D), lambda i: (0, 0)),
                  pl.BlockSpec((1, D), lambda i: (0, 0))],
        out_specs=pl.BlockSpec((tm, D), lambda i: (i, 0)),
        out_shape=jax.ShapeDtypeStruct((M, D), jnp.float32),
        compiler_params=pltpu.CompilerParams(dimension_semantics=("parallel",)),
    )(x, w1, b1.reshape(1, F), w2, b2.reshape(1, D),
      gamma.reshape(1, D), beta.reshape(1, D))


def pallas_self_attention(qkv, mask, num_heads):
    """qkv:(B,T,3D) fused projection, mask:(B,T,T) -> (B,T,D)."""
    B, T, threeD = qkv.shape
    D = threeD // 3
    return pl.pallas_call(
        functools.partial(_attn_self_kernel, num_heads=num_heads),
        grid=(B,),
        in_specs=[pl.BlockSpec((1, T, threeD), lambda b: (b, 0, 0)),
                  pl.BlockSpec((1, T, T), lambda b: (b, 0, 0))],
        out_specs=pl.BlockSpec((1, T, D), lambda b: (b, 0, 0)),
        out_shape=jax.ShapeDtypeStruct((B, T, D), jnp.float32),
        compiler_params=pltpu.CompilerParams(dimension_semantics=("parallel",)),
    )(qkv, mask)


def pallas_cross_attention(q, kv, mask, num_heads):
    """q:(B,Tq,D), kv:(B,Tk,2D) fused projection, mask:(B,Tq,Tk) -> (B,Tq,D)."""
    B, Tq, D = q.shape
    Tk = kv.shape[1]
    return pl.pallas_call(
        functools.partial(_attn_cross_kernel, num_heads=num_heads),
        grid=(B,),
        in_specs=[pl.BlockSpec((1, Tq, D), lambda b: (b, 0, 0)),
                  pl.BlockSpec((1, Tk, 2 * D), lambda b: (b, 0, 0)),
                  pl.BlockSpec((1, Tq, Tk), lambda b: (b, 0, 0))],
        out_specs=pl.BlockSpec((1, Tq, D), lambda b: (b, 0, 0)),
        out_shape=jax.ShapeDtypeStruct((B, Tq, D), jnp.float32),
        compiler_params=pltpu.CompilerParams(dimension_semantics=("parallel",)),
    )(q, kv, mask)


# ---------------------------------------------------------------------------
# Sub-layers
# ---------------------------------------------------------------------------
def self_attention_sublayer(x, mask, p, ln_g, ln_b, num_heads):
    B, T, D = x.shape
    xf = x.reshape(B * T, D)
    qkv = pallas_linear(xf, p["wqkv"], p["bqkv"]).reshape(B, T, 3 * D)
    attn = pallas_self_attention(qkv, mask.astype(jnp.float32), num_heads)
    out = pallas_linear_res_ln(attn.reshape(B * T, D), p["wo"], p["bo"],
                               xf, ln_g, ln_b)
    return out.reshape(B, T, D)


def cross_attention_sublayer(x, enc, mask, p, ln_g, ln_b, num_heads):
    B, Tq, D = x.shape
    Tk = enc.shape[1]
    xf = x.reshape(B * Tq, D)
    q = pallas_linear(xf, p["wq"], p["bq"]).reshape(B, Tq, D)
    kv = pallas_linear(enc.reshape(B * Tk, D), p["wkv"], p["bkv"]).reshape(B, Tk, 2 * D)
    attn = pallas_cross_attention(q, kv, mask.astype(jnp.float32), num_heads)
    out = pallas_linear_res_ln(attn.reshape(B * Tq, D), p["wo"], p["bo"],
                               xf, ln_g, ln_b)
    return out.reshape(B, Tq, D)


# ---------------------------------------------------------------------------
# Parameter construction (deterministic, synthetic) + kernel-ready prep
# ---------------------------------------------------------------------------
def _sinusoidal_pe(max_len, d_model):
    pos = jnp.arange(max_len, dtype=jnp.float32)[:, None]
    i = jnp.arange(d_model, dtype=jnp.float32)[None, :]
    angle = pos / jnp.power(10000.0, (2.0 * jnp.floor(i / 2.0)) / d_model)
    pe = jnp.where((jnp.arange(d_model) % 2) == 0, jnp.sin(angle), jnp.cos(angle))
    return pe.astype(jnp.float32)                  # (max_len, d_model)


def make_decoder_params(key, vocab, max_tgt_len, d_model, num_layers, d_ff):
    keys = iter(jax.random.split(key, 8 + num_layers * 20))

    def lin(k_in, k_out):
        kw, kb = next(keys), next(keys)
        w = jax.random.normal(kw, (k_in, k_out), jnp.float32) * 0.05
        b = jax.random.normal(kb, (k_out,), jnp.float32) * 0.01
        return w, b

    def attn_params():
        wq, bq = lin(d_model, d_model)
        wk, bk = lin(d_model, d_model)
        wv, bv = lin(d_model, d_model)
        wo, bo = lin(d_model, d_model)
        return dict(wq=wq, bq=bq, wk=wk, bk=bk, wv=wv, bv=bv, wo=wo, bo=bo)

    params = {
        "emb": jax.random.normal(next(keys), (vocab, d_model), jnp.float32),
        "pe": _sinusoidal_pe(max_tgt_len, d_model),
        "layers": [],
    }
    for _ in range(num_layers):
        w1, b1 = lin(d_model, d_ff)
        w2, b2 = lin(d_ff, d_model)
        params["layers"].append(dict(
            self_attn=attn_params(),
            cross_attn=attn_params(),
            ff_w1=w1, ff_b1=b1, ff_w2=w2, ff_b2=b2,
            ln1_g=jnp.ones((d_model,), jnp.float32), ln1_b=jnp.zeros((d_model,), jnp.float32),
            ln2_g=jnp.ones((d_model,), jnp.float32), ln2_b=jnp.zeros((d_model,), jnp.float32),
            ln3_g=jnp.ones((d_model,), jnp.float32), ln3_b=jnp.zeros((d_model,), jnp.float32),
        ))
    ow, ob = lin(d_model, vocab)                   # share_dec_pro_emb = False
    params["out_w"], params["out_b"] = ow, ob
    return params


def prepare_decoder_params(raw, num_heads, mxu_dtype=MXU_DTYPE):
    """One-time prep: fold 1/sqrt(dh) into Q weights, fuse QKV / KV weight
    matrices, and cast MXU weight operands to bf16 (biases / LN stay f32)."""
    D = raw["emb"].shape[1]
    dh = D // num_heads
    scale = 1.0 / math.sqrt(dh)

    def prep_self(a):
        wqkv = jnp.concatenate([a["wq"] * scale, a["wk"], a["wv"]], axis=1)
        bqkv = jnp.concatenate([a["bq"] * scale, a["bk"], a["bv"]], axis=0)
        return dict(wqkv=wqkv.astype(mxu_dtype), bqkv=bqkv,
                    wo=a["wo"].astype(mxu_dtype), bo=a["bo"])

    def prep_cross(a):
        wkv = jnp.concatenate([a["wk"], a["wv"]], axis=1)
        bkv = jnp.concatenate([a["bk"], a["bv"]], axis=0)
        return dict(wq=(a["wq"] * scale).astype(mxu_dtype), bq=a["bq"] * scale,
                    wkv=wkv.astype(mxu_dtype), bkv=bkv,
                    wo=a["wo"].astype(mxu_dtype), bo=a["bo"])

    layers = []
    for L in raw["layers"]:
        layers.append(dict(
            self_attn=prep_self(L["self_attn"]),
            cross_attn=prep_cross(L["cross_attn"]),
            ff_w1=L["ff_w1"].astype(mxu_dtype), ff_b1=L["ff_b1"],
            ff_w2=L["ff_w2"].astype(mxu_dtype), ff_b2=L["ff_b2"],
            ln1_g=L["ln1_g"], ln1_b=L["ln1_b"],
            ln2_g=L["ln2_g"], ln2_b=L["ln2_b"],
            ln3_g=L["ln3_g"], ln3_b=L["ln3_b"],
        ))
    return dict(emb=raw["emb"], pe=raw["pe"], layers=layers,
                out_w=raw["out_w"].astype(mxu_dtype), out_b=raw["out_b"])


# ---------------------------------------------------------------------------
# Decoder forward (mirrors Decoder.forward / DecoderLayer.forward, eval mode)
# ---------------------------------------------------------------------------
def decoder_forward(params, tgt_ids, encoder_src, tgt_mask, src_mask, num_heads):
    B, T = tgt_ids.shape
    D = params["emb"].shape[1]

    # token embedding (gather kept as XLA glue) * sqrt(d_model) + sinusoidal PE
    x = params["emb"][tgt_ids] * jnp.sqrt(jnp.float32(D))
    x = x + params["pe"][:T][None, :, :]
    # dropout(p=0) -> identity

    for L in params["layers"]:
        x = self_attention_sublayer(x, tgt_mask, L["self_attn"],
                                    L["ln1_g"], L["ln1_b"], num_heads)
        x = cross_attention_sublayer(x, encoder_src, src_mask, L["cross_attn"],
                                     L["ln2_g"], L["ln2_b"], num_heads)
        x = pallas_ffn(x.reshape(B * T, D), L["ff_w1"], L["ff_b1"],
                       L["ff_w2"], L["ff_b2"],
                       L["ln3_g"], L["ln3_b"]).reshape(B, T, D)

    logits = pallas_linear(x.reshape(B * T, D), params["out_w"], params["out_b"])
    return logits.reshape(B, T, -1)


# ---------------------------------------------------------------------------
if __name__ == "__main__":
    # small shapes
    VOCAB, MAX_TGT_LEN = 50, 16
    D_MODEL, NUM_LAYERS, NUM_HEADS, D_FF = 32, 2, 4, 64
    B, T_TGT, T_SRC = 2, 8, 8

    key = jax.random.PRNGKey(0)
    kp, kt, ke = jax.random.split(key, 3)

    raw_params = make_decoder_params(kp, VOCAB, MAX_TGT_LEN, D_MODEL, NUM_LAYERS, D_FF)
    params = prepare_decoder_params(raw_params, NUM_HEADS)

    tgt_ids = jax.random.randint(kt, (B, T_TGT), 0, VOCAB, dtype=jnp.int32)
    encoder_src = jax.random.normal(ke, (B, T_SRC, D_MODEL), jnp.float32)

    # causal self-attn mask (B, Tq, Tq); full-visibility cross-attn mask (B, Tq, Ts)
    tgt_mask = jnp.tril(jnp.ones((T_TGT, T_TGT), jnp.float32))[None].repeat(B, axis=0)
    src_mask = jnp.ones((B, T_TGT, T_SRC), jnp.float32)

    logits = decoder_forward(params, tgt_ids, encoder_src, tgt_mask, src_mask, NUM_HEADS)
    logits = jax.block_until_ready(logits)

    assert logits.shape == (B, T_TGT, VOCAB), logits.shape
    assert bool(jnp.all(jnp.isfinite(logits)))
    print("KERNEL_OK")
</pallas_src>

<mosaic_0001>
module attributes {stable_mosaic.version = 11 : i64} {
  func.func @_linear_kernel(%arg0: i32, %arg1: i32, %arg2: i32, %arg3: memref<16x32xf32, #tpu.memory_space<vmem>>, %arg4: memref<32x96xbf16, #tpu.memory_space<vmem>>, %arg5: memref<1x96xf32, #tpu.memory_space<vmem>>, %arg6: memref<16x96xf32, #tpu.memory_space<vmem>>, %arg7: memref<16x96xf32, #tpu.memory_space<vmem>>) attributes {dimension_semantics = [#tpu.dimension_semantics<parallel>, #tpu.dimension_semantics<parallel>, #tpu.dimension_semantics<arbitrary>], iteration_bounds = array<i64: 1, 1, 1>, scalar_prefetch = 0 : i64, scratch_operands = 1 : i64, tpu.core_type = #tpu.core_type<tc>, window_params = [{transform_indices = @transform_0, window_bounds = array<i64: 16, 32>}, {transform_indices = @transform_1, window_bounds = array<i64: 32, 96>}, {transform_indices = @transform_2, window_bounds = array<i64: 1, 96>}, {transform_indices = @transform_3, window_bounds = array<i64: 16, 96>}]} {
    %c0_i32 = arith.constant 0 : i32
    %0 = arith.cmpi eq, %arg2, %c0_i32 : i32
    %1 = arith.extui %0 : i1 to i32
    %c0_i32_0 = arith.constant 0 : i32
    %2 = arith.cmpi ne, %1, %c0_i32_0 : i32
    scf.if %2 {
      %cst_10 = arith.constant 0.000000e+00 : f32
      %13 = vector.broadcast %cst_10 : f32 to vector<16x96xf32>
      %c0_11 = arith.constant 0 : index
      %c0_12 = arith.constant 0 : index
      %14 = vector.load %arg7[%c0_11, %c0_12] : memref<16x96xf32, #tpu.memory_space<vmem>>, vector<16x96xf32>
      tpu.vector_store %arg7[%c0_11, %c0_12], %13 {strides = array<i32>} : memref<16x96xf32, #tpu.memory_space<vmem>>, vector<16x96xf32>,
    } else {
    }
    %c0 = arith.constant 0 : index
    %c0_1 = arith.constant 0 : index
    %3 = vector.load %arg7[%c0, %c0_1] : memref<16x96xf32, #tpu.memory_space<vmem>>, vector<16x96xf32>
    %c0_2 = arith.constant 0 : index
    %c0_3 = arith.constant 0 : index
    %4 = vector.load %arg3[%c0_2, %c0_3] : memref<16x32xf32, #tpu.memory_space<vmem>>, vector<16x32xf32>
    %5 = arith.truncf %4 : vector<16x32xf32> to vector<16x32xbf16>
    %c0_4 = arith.constant 0 : index
    %c0_5 = arith.constant 0 : index
    %6 = vector.load %arg4[%c0_4, %c0_5] : memref<32x96xbf16, #tpu.memory_space<vmem>>, vector<32x96xbf16>
    %cst = arith.constant dense<0.000000e+00> : vector<16x96xf32>
    %7 = tpu.matmul %5, %6, %cst {dimension_numbers = #tpu.dot_dimension_numbers<[1], [0], [0], [1], [0, 0, 1, 1], [], []>} : vector<16x32xbf16>, vector<32x96xbf16>, vector<16x96xf32> -> vector<16x96xf32>
    %8 = arith.addf %3, %7 : vector<16x96xf32>
    %c0_6 = arith.constant 0 : index
    %c0_7 = arith.constant 0 : index
    %9 = vector.load %arg7[%c0_6, %c0_7] : memref<16x96xf32, #tpu.memory_space<vmem>>, vector<16x96xf32>
    tpu.vector_store %arg7[%c0_6, %c0_7], %8 {strides = array<i32>} : memref<16x96xf32, #tpu.memory_space<vmem>>, vector<16x96xf32>,
    %c0_i32_8 = arith.constant 0 : i32
    %10 = arith.cmpi eq, %arg2, %c0_i32_8 : i32
    %11 = arith.extui %10 : i1 to i32
    %c0_i32_9 = arith.constant 0 : i32
    %12 = arith.cmpi ne, %11, %c0_i32_9 : i32
    scf.if %12 {
      %c0_10 = arith.constant 0 : index
      %c0_11 = arith.constant 0 : index
      %13 = vector.load %arg7[%c0_10, %c0_11] : memref<16x96xf32, #tpu.memory_space<vmem>>, vector<16x96xf32>
      %c0_12 = arith.constant 0 : index
      %c0_13 = arith.constant 0 : index
      %14 = vector.load %arg5[%c0_12, %c0_13] : memref<1x96xf32, #tpu.memory_space<vmem>>, vector<1x96xf32>
      %15 = vector.broadcast %14 : vector<1x96xf32> to vector<16x96xf32>
      %16 = arith.addf %13, %15 : vector<16x96xf32>
      %c0_14 = arith.constant 0 : index
      %c0_15 = arith.constant 0 : index
      %17 = vector.load %arg6[%c0_14, %c0_15] : memref<16x96xf32, #tpu.memory_space<vmem>>, vector<16x96xf32>
      tpu.vector_store %arg6[%c0_14, %c0_15], %16 {strides = array<i32>} : memref<16x96xf32, #tpu.memory_space<vmem>>, vector<16x96xf32>,
    } else {
    }
    return
  }
  func.func @transform_0(%arg0: i32, %arg1: i32, %arg2: i32) -> (i32, i32) {
    %c0_i32 = arith.constant 0 : i32
    return %arg0, %arg2 : i32, i32
  }
  func.func @transform_1(%arg0: i32, %arg1: i32, %arg2: i32) -> (i32, i32) {
    %c0_i32 = arith.constant 0 : i32
    return %arg2, %arg1 : i32, i32
  }
  func.func @transform_2(%arg0: i32, %arg1: i32, %arg2: i32) -> (i32, i32) {
    %c0_i32 = arith.constant 0 : i32
    %c0_i32_0 = arith.constant 0 : i32
    return %c0_i32, %arg1 : i32, i32
  }
  func.func @transform_3(%arg0: i32, %arg1: i32, %arg2: i32) -> (i32, i32) {
    %c0_i32 = arith.constant 0 : i32
    return %arg0, %arg1 : i32, i32
  }
}

</mosaic_0001>

<llo_original>
// kernel: tpu_custom_call.1
$region0: #{tpu_custom_call.1}
  #allocation0 [shape = 'u32[]', space=smem, size = 0x4, offset = 0x4, fixed_abs, tag = 'smem constant byte address 0x4 - core index']
  #allocation1 [shape = 'u32[144,128]{1,0:T(1,128)}', space=vmem, size = 0x12000, scoped, tag = 'internal scratch']
  #allocation2 [shape = 'f32[16,96]{1,0:T(8,128)}', space=vmem, size = 0x2000, scoped, tag = 'scratch operand']
  %s0 = inlined_call_operand.hbm [shape: f32[16,32], index: 0, kind: input, shape index: {}]
  %s1 = inlined_call_operand.hbm [shape: bf16[32,96], index: 1, kind: input, shape index: {}]
  %s2 = inlined_call_operand.vmem [shape: f32[1,96], index: 2, kind: input, shape index: {}]
  %s3 = inlined_call_operand.hbm [shape: f32[16,96], index: 3, kind: output, shape index: {}]
  %s4 = sld [smem:[#allocation0]]
  $region38: #{tpu_custom_call.1} parent=0
    _
  %s6 = ssub.s32 1, %s4
  %s7 = scalar_select 0, %s6, %s4
  $region1: #{tpu_custom_call.1} parent=0
    #allocation3 [shape = 'u8[8192]{0}', space=vmem, size = 0x2000, scoped, tag = 'input window, operand 0, single buffered']
    #allocation4 [shape = 's32[1]{0}', space=sflag, size = 0x4, scoped, tag = 'scoped memory for tpu_custom_call.1']
    #allocation5 [shape = 's32[1]{0}', space=sflag, size = 0x4, scoped, tag = 'scoped memory for tpu_custom_call.1']
    #allocation6 [shape = 'u8[8192]{0}', space=vmem, size = 0x2000, scoped, tag = 'input window, operand 1, single buffered']
    #allocation7 [shape = 's32[1]{0}', space=sflag, size = 0x4, scoped, tag = 'scoped memory for tpu_custom_call.1']
    #allocation8 [shape = 'u8[8192]{0}', space=vmem, size = 0x2000, scoped, tag = 'output window, operand 0, single buffered']
    %8 = vsyncpa [#allocation4], 0
    %9 = vsyncpa [#allocation7], 0
    %10 = vsyncpa [#allocation5], 0
    // Predicated region
    $region2: #{tpu_custom_call.1} parent=1 // pred_check
      _
    $region3: #{tpu_custom_call.1} parent=1 // pred_check_branch
      %12 = sbr.rel (0) target = $region5
    $region4: #{tpu_custom_call.1} parent=1 // pred_region
      %s14 = ssub.s32 256, 256
      %15 = vsyncadd [#allocation4], %s14
      %s16 = sshll.u32 [#allocation3], 4
      %s17 = int_to_ptr.vmem [resolvable:$true] %s16
      %22 = dma.hbm_to_vmem [thread:$0]  %s0, 256, %s17, [#allocation4], 128, 128, 8
    $region5: #{tpu_custom_call.1} parent=1 // pred_fallthru
      _
    // Predicated region
    $region6: #{tpu_custom_call.1} parent=1 // pred_check
      _
    $region7: #{tpu_custom_call.1} parent=1 // pred_check_branch
      %24 = sbr.rel (0) target = $region9
    $region8: #{tpu_custom_call.1} parent=1 // pred_region
      %s26 = ssub.s32 256, 256
      %27 = vsyncadd [#allocation7], %s26
      %s28 = sshll.u32 [#allocation6], 4
      %s29 = int_to_ptr.vmem [resolvable:$true] %s28
      %34 = dma.hbm_to_vmem [thread:$0]  %s1, 256, %s29, [#allocation7], 64, 64, 4
    $region9: #{tpu_custom_call.1} parent=1 // pred_fallthru
      _
    // Predicated region
    $region10: #{tpu_custom_call.1} parent=1 // pred_check
      _
    $region11: #{tpu_custom_call.1} parent=1 // pred_check_branch
      %36 = sbr.rel (0) target = $region13
    $region12: #{tpu_custom_call.1} parent=1 // pred_region
      _
    $region13: #{tpu_custom_call.1} parent=1 // pred_fallthru
      _
    // Predicated region
    $region14: #{tpu_custom_call.1} parent=1 // pred_check
      _
    $region15: #{tpu_custom_call.1} parent=1 // pred_check_branch
      %38 = sbr.rel (0) target = $region17
    $region16: #{tpu_custom_call.1} parent=1 // pred_region
      %39 = dma.done [#allocation4], 256
    $region17: #{tpu_custom_call.1} parent=1 // pred_fallthru
      _
    // Predicated region
    $region18: #{tpu_custom_call.1} parent=1 // pred_check
      _
    $region19: #{tpu_custom_call.1} parent=1 // pred_check_branch
      %41 = sbr.rel (0) target = $region21
    $region20: #{tpu_custom_call.1} parent=1 // pred_region
      %42 = dma.done [#allocation7], 256
    $region21: #{tpu_custom_call.1} parent=1 // pred_fallthru
      _
    %p44 = scmp.eq.s32.totalorder 0, 0
    // Predicated region
    $region22: #{tpu_custom_call.1} parent=1 // pred_check
      %p45 = pneg %p44
    $region23: #{tpu_custom_call.1} parent=1 // pred_check_branch
      %47 = sbr.rel (%p45) target = $region25
    $region24: #{tpu_custom_call.1} parent=1 // pred_region
      %vm48 = vcmask 785408
      %49 = vst.msk [vmem:[#allocation2] sm:$0xff] %vm48, 0.0
      %50 = vst.msk [vmem:[#allocation2 + $0x8] sm:$0xff] %vm48, 0.0
    $region25: #{tpu_custom_call.1} parent=1 // pred_fallthru
      _
    %v51 = vld [vmem:[#allocation2] sm:$0xff]
    %v52 = vld [vmem:[#allocation2 + $0x8] sm:$0xff]
    %v53 = vld [vmem:[#allocation3] sm:$0xff]
    %v54 = vld [vmem:[#allocation3 + $0x8] sm:$0xff]
    %v55 = vpack.c.bf16 %v54, %v53
    %v56 = vld [vmem:[#allocation6] sm:$0xf]
    %v57 = vld [vmem:[#allocation6 + $0x4] sm:$0xf]
    %v58 = vld [vmem:[#allocation6 + $0x8] sm:$0xf]
    %v59 = vld [vmem:[#allocation6 + $0xc] sm:$0xf]
    %v64 = vunpack.c.l.b16 %v56
    %v65 = vunpack.c.l.b16 %v57
    %v66 = vunpack.c.l.b16 %v58
    %v67 = vunpack.c.l.b16 %v59
    %v68 = vpack.c.b16 %v65, %v64
    %v69 = vpack.c.b16 %v67, %v66
    %vm72 = vcmask 261120
    %v74 = vsel %vm72, %v55, 0
    %76 = vmatprep.subr.bf16.mxu0 0
    %77 = vmatpush1.bf16.msra.mxu0 %v68
    %78 = vmatprep.subr.bf16.mxu0 0
    %79 = vmatpush1.bf16.msra.mxu0 %v69
    %80 = vmatprep.subr.bf16.mxu0 0
    %81 = vmatpush1.bf16.msra.mxu0 0
    %82 = vmatprep.subr.bf16.mxu0 0
    %83 = vmatpush1.bf16.msra.mxu0 0
    %84 = vmatprep.subr.bf16.mxu0 0
    %85 = vmatpush1.bf16.msra.mxu0 0
    %86 = vmatprep.subr.bf16.mxu0 0
    %87 = vmatpush1.bf16.msra.mxu0 0
    %88 = vmatprep.subr.bf16.mxu0 0
    %89 = vmatpush1.bf16.msra.mxu0 0
    %90 = vmatprep.subr.bf16.mxu0 0
    %91 = vmatpush1.bf16.msra.mxu0 0
    %92 = vmatprep.subr.bf16.mxu0 0
    %93 = vmatpush1.bf16.msra.mxu0 0
    %94 = vmatprep.subr.bf16.mxu0 0
    %95 = vmatpush1.bf16.msra.mxu0 0
    %96 = vmatprep.subr.bf16.mxu0 0
    %97 = vmatpush1.bf16.msra.mxu0 0
    %98 = vmatprep.subr.bf16.mxu0 0
    %99 = vmatpush1.bf16.msra.mxu0 0
    %100 = vmatprep.subr.bf16.mxu0 0
    %101 = vmatpush1.bf16.msra.mxu0 0
    %102 = vmatprep.subr.bf16.mxu0 0
    %103 = vmatpush1.bf16.msra.mxu0 0
    %104 = vmatprep.subr.bf16.mxu0 0
    %105 = vmatpush1.bf16.msra.mxu0 0
    %106 = vmatprep.subr.bf16.mxu0 0
    %107 = vmatpush1.bf16.msra.mxu0 0
    %108 = vmatprep.mubr.bf16.mxu0 0
    %109 = vmatmul.mubr.bf16.gmra.mrb[0].mxu0 %v74
    %v110 = vpop.f32.mrb[0].mxu0
    %v111 = vadd.f32 0.0, %v110
    %v112 = vpop.f32.mrb[0].mxu0
    %v113 = vpop.f32.mrb[0].mxu0
    %v114 = vadd.f32 0.0, %v113
    %v115 = vpop.f32.mrb[0].mxu0
    %116 = vdwg.mxu0
    %v117 = vadd.f32 %v51, %v111
    %v118 = vadd.f32 %v52, %v114
    %vm119 = vcmask 785408
    %120 = vst.msk [vmem:[#allocation2] sm:$0xff] %vm119, %v117
    %121 = vst.msk [vmem:[#allocation2 + $0x8] sm:$0xff] %vm119, %v118
    // Predicated region
    $region26: #{tpu_custom_call.1} parent=1 // pred_check
      %p122 = pneg %p44
    $region27: #{tpu_custom_call.1} parent=1 // pred_check_branch
      %124 = sbr.rel (%p122) target = $region29
    $region28: #{tpu_custom_call.1} parent=1 // pred_region
      %v125 = vld [vmem:[#allocation2] sm:$0xff]
      %v126 = vld [vmem:[#allocation2 + $0x8] sm:$0xff]
      %v127 = vld [vmem:[%s2] sm:$0x1]
      %v129 = vlaneseq
      %v130 = vshrl.u32 %v129, 7
      %v131 = vsub.s32 0, %v130
      %v132 = vrot.slane %v127, %v131
      %v134 = vadd.f32 %v125, %v132
      %v135 = vadd.f32 %v126, %v132
      %136 = vst.msk [vmem:[#allocation8] sm:$0xff] %vm119, %v134
      %137 = vst.msk [vmem:[#allocation8 + $0x8] sm:$0xff] %vm119, %v135
    $region29: #{tpu_custom_call.1} parent=1 // pred_fallthru
      _
    // Predicated region
    $region30: #{tpu_custom_call.1} parent=1 // pred_check
      _
    $region31: #{tpu_custom_call.1} parent=1 // pred_check_branch
      %139 = sbr.rel (0) target = $region33
    $region32: #{tpu_custom_call.1} parent=1 // pred_region
      %s141 = ssub.s32 256, 256
      %142 = vsyncadd [#allocation5], %s141
      %s143 = sshll.u32 [#allocation8], 4
      %s144 = int_to_ptr.vmem [resolvable:$true] %s143
      %149 = dma.vmem_to_hbm [thread:$0]  %s144, 256, %s3, [#allocation5], 128, 128, 8
    $region33: #{tpu_custom_call.1} parent=1 // pred_fallthru
      _
    // Predicated region
    $region34: #{tpu_custom_call.1} parent=1 // pred_check
      _
    $region35: #{tpu_custom_call.1} parent=1 // pred_check_branch
      %151 = sbr.rel (0) target = $region37
    $region36: #{tpu_custom_call.1} parent=1 // pred_region
      %152 = dma.done [#allocation5], 256
    $region37: #{tpu_custom_call.1} parent=1 // pred_fallthru
      _
    %153 = vsyncpa [#allocation4], 1
    %154 = vsyncpa [#allocation7], 1
    %155 = vsyncpa [#allocation5], 1

</llo_original>
